<compile_context>
chip_gen: v7x
topology: tpu7x:2x2x1
jax: 0.10.0
libtpu: 0.0.40
codegen_flags: <defaults>
</compile_context>

<pallas_src>
import jax
import jax.numpy as jnp
from jax.experimental import pallas as pl
from jax.experimental.pallas import tpu as pltpu

NUM_TOKENS = 157
ENC_OUT = 4                       # encode_linear output width
GRU_IN = 2 * ENC_OUT + 2          # 10  (v0 | mid0 | v1 | mid1)
IN_DIM = 2 * NUM_TOKENS + 2       # 316 (raw node feature width)


# --------------------------- kernel 1: encoder + torch.cat (runs once over x) ----------------
def encoder_kernel(xT_ref, we_ref, be_ref, aT_ref):
    # aT = W_enc^T @ x^T + b_enc^T  -> [10, tile] (node-on-lanes layout), stored bf16
    a = jnp.dot(we_ref[...], xT_ref[...],
                preferred_element_type=jnp.float32) + be_ref[...]
    aT_ref[...] = a.astype(jnp.bfloat16)


# --------------------------- kernel 2: GConvGRU cell + ReLU + Linear + sigmoid --------------
def gcn_cell_kernel(aT_full_ref, aT_tile_ref, sT_ref, wg_ref, bg_ref, wl_ref, bl_ref, out_ref):
    f32 = jnp.float32
    bf16 = jnp.bfloat16
    flt = wl_ref.shape[0]

    # (S a)^T for this column tile of nodes:  [10, N] @ [N, tile] -> [10, tile]
    saT = jnp.dot(aT_full_ref[...], sT_ref[...], preferred_element_type=f32)

    # ChebConv(K=2) folded along the contraction axis: [a^T ; (S a)^T] -> [20, tile] bf16
    xaT = jnp.concatenate([aT_tile_ref[...], saT.astype(bf16)], axis=0)

    # both live gates in ONE MXU push: [2F, 20] @ [20, tile] -> [2F, tile] f32
    # (H=None: h-side ChebConvs reduce to biases, already folded into bg on the host)
    g = jnp.dot(wg_ref[...], xaT, preferred_element_type=f32) + bg_ref[...]
    z = jax.nn.sigmoid(g[:flt, :])           # update gate
    h_tilde = jnp.tanh(g[flt:, :])           # candidate hidden state
    h_new = (1.0 - z) * h_tilde              # == Z*H + (1-Z)*H_tilde with H = 0

    # ReLU -> Linear(F, 1) -> sigmoid.  Projection = VPU multiply + cross-sublane reduce,
    # producing a lane-dense [1, tile] row (unmasked stores).
    h_relu = jnp.maximum(h_new, 0.0)
    logit = jnp.sum(h_relu * wl_ref[...], axis=0, keepdims=True) + bl_ref[...]
    out_ref[...] = jax.nn.sigmoid(logit)


# --------------------------- graph preprocessing --------------------------------------------
def scaled_laplacian_dense(edge_index, num_nodes):
    # ChebConv(normalization='sym', edge_weight=None, lambda_max=2):
    #   L_hat = (2/lambda_max) * (I - D^-1/2 A D^-1/2) - I = -D^-1/2 A D^-1/2
    src, dst = edge_index[0], edge_index[1]
    adj = jnp.zeros((num_nodes, num_nodes), jnp.float32).at[dst, src].add(1.0)
    deg = adj.sum(axis=1)
    dinv = jnp.where(deg > 0, 1.0 / jnp.sqrt(deg), 0.0)
    return -(dinv[:, None] * adj) * dinv[None, :]


# --------------------------- params (torch-style) + host-side packing -----------------------
def init_params(key, filters):
    def nrm(k, shape, scale=0.1):
        return scale * jax.random.normal(k, shape, jnp.float32)

    ks = iter(jax.random.split(key, 32))
    p = {}
    # encode_linear: nn.Linear(157, 4) -> store W^T [157,4], bias [1,4]
    p["we_t"] = nrm(next(ks), (NUM_TOKENS, ENC_OUT))
    p["be"] = nrm(next(ks), (1, ENC_OUT))
    # GConvGRU(10, filters, K=2): 6 ChebConvs (stored transposed) + biases.  r-gate and
    # h-side weights are part of the module but dead in the single-step H=None forward.
    for g in ("z", "r", "h"):
        p[f"wx{g}0"] = nrm(next(ks), (GRU_IN, filters))
        p[f"wx{g}1"] = nrm(next(ks), (GRU_IN, filters))
        p[f"bx{g}"] = nrm(next(ks), (1, filters))
        p[f"wh{g}0"] = nrm(next(ks), (filters, filters))
        p[f"wh{g}1"] = nrm(next(ks), (filters, filters))
        p[f"bh{g}"] = nrm(next(ks), (1, filters))
    # output linear: nn.Linear(filters, 1)
    p["wl_t"] = nrm(next(ks), (filters, 1))
    p["bl"] = nrm(next(ks), (1, 1))
    return p


def pack_params(params, s_hat):
    """One-time host-side packing into the node-on-lanes (transposed) kernel operands."""
    # encoder + torch.cat glue as a single [316, 10] matrix (+ [1, 10] bias):
    #   cols 0:4  = x[:,0:157]   @ We^T + be
    #   col  4    = x[:,157]
    #   cols 5:9  = x[:,158:315] @ We^T + be
    #   col  9    = x[:,315]
    w_enc = jnp.zeros((IN_DIM, GRU_IN), jnp.float32)
    w_enc = w_enc.at[0:NUM_TOKENS, 0:ENC_OUT].set(params["we_t"])
    w_enc = w_enc.at[NUM_TOKENS, ENC_OUT].set(1.0)
    w_enc = w_enc.at[NUM_TOKENS + 1:2 * NUM_TOKENS + 1,
                     ENC_OUT + 1:2 * ENC_OUT + 1].set(params["we_t"])
    w_enc = w_enc.at[2 * NUM_TOKENS + 1, 2 * ENC_OUT + 1].set(1.0)
    b_enc = jnp.zeros((1, GRU_IN), jnp.float32)
    b_enc = b_enc.at[:, 0:ENC_OUT].set(params["be"])
    b_enc = b_enc.at[:, ENC_OUT + 1:2 * ENC_OUT + 1].set(params["be"])

    # Both live gates packed along the OUTPUT axis ([2F, 20] in transposed layout) so the
    # kernel needs a single MXU push.  H=None: h-side ChebConvs collapse to their biases.
    wz = jnp.concatenate([params["wxz0"].T, params["wxz1"].T], axis=1)   # [F, 20]
    wh = jnp.concatenate([params["wxh0"].T, params["wxh1"].T], axis=1)   # [F, 20]
    wg_t = jnp.concatenate([wz, wh], axis=0)                             # [2F, 20]
    bg_t = jnp.concatenate([(params["bxz"] + params["bhz"]).T,
                            (params["bxh"] + params["bhh"]).T], axis=0)  # [2F, 1]

    return {
        # bf16 MXU operands (accumulation stays f32 inside the kernels)
        "s_t": s_hat.T.astype(jnp.bfloat16),        # S^T, streamed as column tiles
        "we_t": w_enc.T.astype(jnp.bfloat16),       # [10, 316] fused encoder weight
        "wg_t": wg_t.astype(jnp.bfloat16),          # [2F, 20] packed gate weights
        # f32 post-accumulation / elementwise operands
        "be_t": b_enc.T,                            # [10, 1]
        "bg_t": bg_t,                               # [2F, 1]
        "wl_t": params["wl_t"],                     # [F, 1] output linear weight (column)
        "bl": params["bl"].reshape(1, 1),           # [1, 1]
    }


# --------------------------- wrapper ---------------------------------------------------------
def recurrent_gcn_forward(x, packed, col_tile=None):
    n = x.shape[0]
    flt = packed["wl_t"].shape[0]

    if col_tile is None:
        if n <= 512:
            col_tile = n                       # latency-bound regime: single grid step
        else:
            # dominant stream is the S^T column tile ([N, tile] bf16, double-buffered);
            # keep 2 * N * tile * 2B <= ~12 MiB so the kernel fits v7x's 64 MiB VMEM
            budget = 12 * 1024 * 1024
            col_tile = max(128, min(512, (budget // (4 * n)) // 128 * 128))
    assert n % col_tile == 0                   # TODO(synk): pad N for ragged sizes
    assert col_tile == n or col_tile % 128 == 0
    grid = (n // col_tile,)

    # host: one-time cast to bf16 (+ layout flip to node-on-lanes); no per-step VPU cast
    xT = x.T.astype(jnp.bfloat16)              # [316, N]

    cparams = pltpu.CompilerParams(
        dimension_semantics=("parallel",),     # column tiles shard across v7x's 2 TCs
        vmem_limit_bytes=32 * 1024 * 1024,     # v5e default scoped limit is only 16 MiB
    )
    const = lambda i: (0, 0)

    # pass 1: encoder + torch.cat, executed exactly once over x -> aT [10, N] bf16 (tiny)
    aT = pl.pallas_call(
        encoder_kernel,
        out_shape=jax.ShapeDtypeStruct((GRU_IN, n), jnp.bfloat16),
        grid=grid,
        in_specs=[
            pl.BlockSpec((IN_DIM, col_tile), lambda i: (0, i)),   # x^T column tile (streamed)
            pl.BlockSpec((GRU_IN, IN_DIM), const),                # fused encoder weight
            pl.BlockSpec((GRU_IN, 1), const),                     # fused encoder bias
        ],
        out_specs=pl.BlockSpec((GRU_IN, col_tile), lambda i: (0, i)),
        compiler_params=cparams,
    )(xT, packed["we_t"], packed["be_t"])

    # pass 2: GConvGRU cell (H=None) + ReLU + Linear + sigmoid, lane-dense (1, N) output
    out_row = pl.pallas_call(
        gcn_cell_kernel,
        out_shape=jax.ShapeDtypeStruct((1, n), jnp.float32),
        grid=grid,
        in_specs=[
            pl.BlockSpec((GRU_IN, n), const),                     # a^T (tiny, resident)
            pl.BlockSpec((GRU_IN, col_tile), lambda i: (0, i)),   # a^T column tile
            pl.BlockSpec((n, col_tile), lambda i: (0, i)),        # S^T column tile (dominant)
            pl.BlockSpec((2 * flt, 2 * GRU_IN), const),           # packed gate weights
            pl.BlockSpec((2 * flt, 1), const),                    # packed gate biases
            pl.BlockSpec((flt, 1), const),                        # output linear weight
            pl.BlockSpec((1, 1), const),                          # output linear bias
        ],
        out_specs=pl.BlockSpec((1, col_tile), lambda i: (0, i)),
        compiler_params=cparams,
    )(aT, aT, packed["s_t"], packed["wg_t"], packed["bg_t"], packed["wl_t"], packed["bl"])

    return out_row.reshape(n, 1)               # free relayout: same linear order as (1, N)


# --------------------------- pure-JAX reference (full f32, unspecialized) -------------------
def reference_forward(x, s_hat, p):
    v0 = x[:, 0:NUM_TOKENS] @ p["we_t"] + p["be"]
    v1 = x[:, NUM_TOKENS + 1:2 * NUM_TOKENS + 1] @ p["we_t"] + p["be"]
    a = jnp.concatenate([v0, x[:, NUM_TOKENS:NUM_TOKENS + 1], v1,
                         x[:, 2 * NUM_TOKENS + 1:2 * NUM_TOKENS + 2]], axis=1)
    h = jnp.zeros((x.shape[0], p["wl_t"].shape[0]), jnp.float32)

    def cheb(xx, w0, w1, b):
        return xx @ w0 + (s_hat @ xx) @ w1 + b

    z = jax.nn.sigmoid(cheb(a, p["wxz0"], p["wxz1"], p["bxz"]) +
                       cheb(h, p["whz0"], p["whz1"], p["bhz"]))
    r = jax.nn.sigmoid(cheb(a, p["wxr0"], p["wxr1"], p["bxr"]) +
                       cheb(h, p["whr0"], p["whr1"], p["bhr"]))
    h_tilde = jnp.tanh(cheb(a, p["wxh0"], p["wxh1"], p["bxh"]) +
                       cheb(h * r, p["whh0"], p["whh1"], p["bhh"]))
    h_new = z * h + (1.0 - z) * h_tilde
    return jax.nn.sigmoid(jnp.maximum(h_new, 0.0) @ p["wl_t"] + p["bl"])


if __name__ == "__main__":
    N = 64          # number of graph nodes
    FILTERS = 32    # GConvGRU hidden size

    key = jax.random.PRNGKey(0)
    k_x, k_p = jax.random.split(key)

    # node features: [N, 2*num_tokens + 2] = [64, 316]
    x = jax.random.normal(k_x, (N, IN_DIM), jnp.float32)

    # synthetic undirected ring graph edge_index [2, 2N]
    src = jnp.arange(N, dtype=jnp.int32)
    dst = (src + 1) % N
    edge_index = jnp.stack([jnp.concatenate([src, dst]),
                            jnp.concatenate([dst, src])], axis=0)

    s_hat = scaled_laplacian_dense(edge_index, N)
    params = init_params(k_p, FILTERS)
    packed = pack_params(params, s_hat)

    out = jax.jit(recurrent_gcn_forward)(x, packed)
    out = jax.block_until_ready(out)

    assert out.shape == (N, 1) and out.dtype == jnp.float32
    assert bool(jnp.all(jnp.isfinite(out)))

    # parity with the unspecialized full-f32 reference (bf16 MXU operands -> loose tolerance)
    ref = reference_forward(x, s_hat, params)
    assert bool(jnp.allclose(out, ref, atol=3e-2)), float(jnp.max(jnp.abs(out - ref)))

    print("KERNEL_OK")
</pallas_src>

<mosaic_0001>
module attributes {stable_mosaic.version = 11 : i64} {
  func.func @encoder_kernel(%arg0: i32, %arg1: memref<316x64xbf16, #tpu.memory_space<vmem>>, %arg2: memref<10x316xbf16, #tpu.memory_space<vmem>>, %arg3: memref<10x1xf32, #tpu.memory_space<vmem>>, %arg4: memref<10x64xbf16, #tpu.memory_space<vmem>>) attributes {dimension_semantics = [#tpu.dimension_semantics<parallel>], iteration_bounds = array<i64: 1>, scalar_prefetch = 0 : i64, scratch_operands = 0 : i64, tpu.core_type = #tpu.core_type<tc>, window_params = [{transform_indices = @transform_0, window_bounds = array<i64: 316, 64>}, {pipeline_mode = #tpu.pipeline_mode<synchronous>, transform_indices = @transform_1, window_bounds = array<i64: 10, 316>}, {pipeline_mode = #tpu.pipeline_mode<synchronous>, transform_indices = @transform_2, window_bounds = array<i64: 10, 1>}, {transform_indices = @transform_3, window_bounds = array<i64: 10, 64>}]} {
    %c0 = arith.constant 0 : index
    %c0_0 = arith.constant 0 : index
    %0 = vector.load %arg2[%c0, %c0_0] : memref<10x316xbf16, #tpu.memory_space<vmem>>, vector<10x316xbf16>
    %c0_1 = arith.constant 0 : index
    %c0_2 = arith.constant 0 : index
    %1 = vector.load %arg1[%c0_1, %c0_2] : memref<316x64xbf16, #tpu.memory_space<vmem>>, vector<316x64xbf16>
    %cst = arith.constant dense<0.000000e+00> : vector<10x64xf32>
    %2 = tpu.matmul %0, %1, %cst {dimension_numbers = #tpu.dot_dimension_numbers<[1], [0], [0], [1], [0, 0, 1, 1], [], []>} : vector<10x316xbf16>, vector<316x64xbf16>, vector<10x64xf32> -> vector<10x64xf32>
    %c0_3 = arith.constant 0 : index
    %c0_4 = arith.constant 0 : index
    %3 = vector.load %arg3[%c0_3, %c0_4] : memref<10x1xf32, #tpu.memory_space<vmem>>, vector<10x1xf32>
    %4 = vector.broadcast %3 : vector<10x1xf32> to vector<10x64xf32>
    %5 = arith.addf %2, %4 : vector<10x64xf32>
    %6 = arith.truncf %5 : vector<10x64xf32> to vector<10x64xbf16>
    %c0_5 = arith.constant 0 : index
    %c0_6 = arith.constant 0 : index
    %7 = vector.load %arg4[%c0_5, %c0_6] : memref<10x64xbf16, #tpu.memory_space<vmem>>, vector<10x64xbf16>
    tpu.vector_store %arg4[%c0_5, %c0_6], %6 {strides = array<i32>} : memref<10x64xbf16, #tpu.memory_space<vmem>>, vector<10x64xbf16>,
    return
  }
  func.func @transform_0(%arg0: i32) -> (i32, i32) {
    %c0_i32 = arith.constant 0 : i32
    %c0_i32_0 = arith.constant 0 : i32
    return %c0_i32, %arg0 : i32, i32
  }
  func.func @transform_1(%arg0: i32) -> (i32, i32) {
    %c0_i32 = arith.constant 0 : i32
    %c0_i32_0 = arith.constant 0 : i32
    %c0_i32_1 = arith.constant 0 : i32
    return %c0_i32, %c0_i32_0 : i32, i32
  }
  func.func @transform_2(%arg0: i32) -> (i32, i32) {
    %c0_i32 = arith.constant 0 : i32
    %c0_i32_0 = arith.constant 0 : i32
    %c0_i32_1 = arith.constant 0 : i32
    return %c0_i32, %c0_i32_0 : i32, i32
  }
  func.func @transform_3(%arg0: i32) -> (i32, i32) {
    %c0_i32 = arith.constant 0 : i32
    %c0_i32_0 = arith.constant 0 : i32
    return %c0_i32, %arg0 : i32, i32
  }
}

module attributes {stable_mosaic.version = 11 : i64} {
  func.func @gcn_cell_kernel(%arg0: i32, %arg1: memref<10x64xbf16, #tpu.memory_space<vmem>>, %arg2: memref<10x64xbf16, #tpu.memory_space<vmem>>, %arg3: memref<64x64xbf16, #tpu.memory_space<vmem>>, %arg4: memref<64x20xbf16, #tpu.memory_space<vmem>>, %arg5: memref<64x1xf32, #tpu.memory_space<vmem>>, %arg6: memref<32x1xf32, #tpu.memory_space<vmem>>, %arg7: memref<1x1xf32, #tpu.memory_space<vmem>>, %arg8: memref<1x64xf32, #tpu.memory_space<vmem>>) attributes {dimension_semantics = [#tpu.dimension_semantics<parallel>], iteration_bounds = array<i64: 1>, scalar_prefetch = 0 : i64, scratch_operands = 0 : i64, tpu.core_type = #tpu.core_type<tc>, window_params = [{pipeline_mode = #tpu.pipeline_mode<synchronous>, transform_indices = @transform_0, window_bounds = array<i64: 10, 64>}, {transform_indices = @transform_1, window_bounds = array<i64: 10, 64>}, {transform_indices = @transform_2, window_bounds = array<i64: 64, 64>}, {pipeline_mode = #tpu.pipeline_mode<synchronous>, transform_indices = @transform_3, window_bounds = array<i64: 64, 20>}, {pipeline_mode = #tpu.pipeline_mode<synchronous>, transform_indices = @transform_4, window_bounds = array<i64: 64, 1>}, {pipeline_mode = #tpu.pipeline_mode<synchronous>, transform_indices = @transform_5, window_bounds = array<i64: 32, 1>}, {pipeline_mode = #tpu.pipeline_mode<synchronous>, transform_indices = @transform_6, window_bounds = array<i64: 1, 1>}, {transform_indices = @transform_7, window_bounds = array<i64: 1, 64>}]} {
    %c0 = arith.constant 0 : index
    %c0_0 = arith.constant 0 : index
    %0 = vector.load %arg1[%c0, %c0_0] : memref<10x64xbf16, #tpu.memory_space<vmem>>, vector<10x64xbf16>
    %c0_1 = arith.constant 0 : index
    %c0_2 = arith.constant 0 : index
    %1 = vector.load %arg3[%c0_1, %c0_2] : memref<64x64xbf16, #tpu.memory_space<vmem>>, vector<64x64xbf16>
    %cst = arith.constant dense<0.000000e+00> : vector<10x64xf32>
    %2 = tpu.matmul %0, %1, %cst {dimension_numbers = #tpu.dot_dimension_numbers<[1], [0], [0], [1], [0, 0, 1, 1], [], []>} : vector<10x64xbf16>, vector<64x64xbf16>, vector<10x64xf32> -> vector<10x64xf32>
    %c0_3 = arith.constant 0 : index
    %c0_4 = arith.constant 0 : index
    %3 = vector.load %arg2[%c0_3, %c0_4] : memref<10x64xbf16, #tpu.memory_space<vmem>>, vector<10x64xbf16>
    %4 = arith.truncf %2 : vector<10x64xf32> to vector<10x64xbf16>
    %5 = tpu.concatenate %3, %4 in 0 : vector<10x64xbf16>, vector<10x64xbf16> -> vector<20x64xbf16>
    %c0_5 = arith.constant 0 : index
    %c0_6 = arith.constant 0 : index
    %6 = vector.load %arg4[%c0_5, %c0_6] : memref<64x20xbf16, #tpu.memory_space<vmem>>, vector<64x20xbf16>
    %cst_7 = arith.constant dense<0.000000e+00> : vector<64x64xf32>
    %7 = tpu.matmul %6, %5, %cst_7 {dimension_numbers = #tpu.dot_dimension_numbers<[1], [0], [0], [1], [0, 0, 1, 1], [], []>} : vector<64x20xbf16>, vector<20x64xbf16>, vector<64x64xf32> -> vector<64x64xf32>
    %c0_8 = arith.constant 0 : index
    %c0_9 = arith.constant 0 : index
    %8 = vector.load %arg5[%c0_8, %c0_9] : memref<64x1xf32, #tpu.memory_space<vmem>>, vector<64x1xf32>
    %9 = vector.broadcast %8 : vector<64x1xf32> to vector<64x64xf32>
    %10 = arith.addf %7, %9 : vector<64x64xf32>
    %11 = vector.extract_strided_slice %10 {offsets = [0, 0], sizes = [32, 64], strides = [1, 1]} : vector<64x64xf32> to vector<32x64xf32>
    %12 = arith.negf %11 : vector<32x64xf32>
    %13 = math.exp %12 : vector<32x64xf32>
    %cst_10 = arith.constant 1.000000e+00 : f32
    %14 = vector.broadcast %cst_10 : f32 to vector<32x64xf32>
    %15 = arith.addf %14, %13 : vector<32x64xf32>
    %16 = arith.divf %14, %15 : vector<32x64xf32>
    %17 = vector.extract_strided_slice %10 {offsets = [32, 0], sizes = [32, 64], strides = [1, 1]} : vector<64x64xf32> to vector<32x64xf32>
    %18 = math.tanh %17 : vector<32x64xf32>
    %cst_11 = arith.constant 1.000000e+00 : f32
    %19 = vector.broadcast %cst_11 : f32 to vector<32x64xf32>
    %20 = arith.subf %19, %16 : vector<32x64xf32>
    %21 = arith.mulf %20, %18 : vector<32x64xf32>
    %cst_12 = arith.constant 0.000000e+00 : f32
    %22 = vector.broadcast %cst_12 : f32 to vector<32x64xf32>
    %23 = arith.maximumf %21, %22 : vector<32x64xf32>
    %c0_13 = arith.constant 0 : index
    %c0_14 = arith.constant 0 : index
    %24 = vector.load %arg6[%c0_13, %c0_14] : memref<32x1xf32, #tpu.memory_space<vmem>>, vector<32x1xf32>
    %25 = vector.broadcast %24 : vector<32x1xf32> to vector<32x64xf32>
    %26 = arith.mulf %23, %25 : vector<32x64xf32>
    %cst_15 = arith.constant dense<0.000000e+00> : vector<64xf32>
    %27 = vector.multi_reduction <add>, %26, %cst_15 [0] : vector<32x64xf32> to vector<64xf32>
    %28 = vector.shape_cast %27 : vector<64xf32> to vector<1x64xf32>
    %c0_16 = arith.constant 0 : index
    %c0_17 = arith.constant 0 : index
    %29 = vector.load %arg7[%c0_16, %c0_17] : memref<1x1xf32, #tpu.memory_space<vmem>>, vector<1x1xf32>
    %30 = vector.broadcast %29 : vector<1x1xf32> to vector<1x64xf32>
    %31 = arith.addf %28, %30 : vector<1x64xf32>
    %32 = arith.negf %31 : vector<1x64xf32>
    %33 = math.exp %32 : vector<1x64xf32>
    %cst_18 = arith.constant 1.000000e+00 : f32
    %34 = vector.broadcast %cst_18 : f32 to vector<1x64xf32>
    %35 = arith.addf %34, %33 : vector<1x64xf32>
    %36 = arith.divf %34, %35 : vector<1x64xf32>
    %c0_19 = arith.constant 0 : index
    %c0_20 = arith.constant 0 : index
    %37 = vector.load %arg8[%c0_19, %c0_20] : memref<1x64xf32, #tpu.memory_space<vmem>>, vector<1x64xf32>
    tpu.vector_store %arg8[%c0_19, %c0_20], %36 {strides = array<i32>} : memref<1x64xf32, #tpu.memory_space<vmem>>, vector<1x64xf32>,
    return
  }
  func.func @transform_0(%arg0: i32) -> (i32, i32) {
    %c0_i32 = arith.constant 0 : i32
    %c0_i32_0 = arith.constant 0 : i32
    %c0_i32_1 = arith.constant 0 : i32
    return %c0_i32, %c0_i32_0 : i32, i32
  }
  func.func @transform_1(%arg0: i32) -> (i32, i32) {
    %c0_i32 = arith.constant 0 : i32
    %c0_i32_0 = arith.constant 0 : i32
    return %c0_i32, %arg0 : i32, i32
  }
  func.func @transform_2(%arg0: i32) -> (i32, i32) {
    %c0_i32 = arith.constant 0 : i32
    %c0_i32_0 = arith.constant 0 : i32
    return %c0_i32, %arg0 : i32, i32
  }
  func.func @transform_3(%arg0: i32) -> (i32, i32) {
    %c0_i32 = arith.constant 0 : i32
    %c0_i32_0 = arith.constant 0 : i32
    %c0_i32_1 = arith.constant 0 : i32
    return %c0_i32, %c0_i32_0 : i32, i32
  }
  func.func @transform_4(%arg0: i32) -> (i32, i32) {
    %c0_i32 = arith.constant 0 : i32
    %c0_i32_0 = arith.constant 0 : i32
    %c0_i32_1 = arith.constant 0 : i32
    return %c0_i32, %c0_i32_0 : i32, i32
  }
  func.func @transform_5(%arg0: i32) -> (i32, i32) {
    %c0_i32 = arith.constant 0 : i32
    %c0_i32_0 = arith.constant 0 : i32
    %c0_i32_1 = arith.constant 0 : i32
    return %c0_i32, %c0_i32_0 : i32, i32
  }
  func.func @transform_6(%arg0: i32) -> (i32, i32) {
    %c0_i32 = arith.constant 0 : i32
    %c0_i32_0 = arith.constant 0 : i32
    %c0_i32_1 = arith.constant 0 : i32
    return %c0_i32, %c0_i32_0 : i32, i32
  }
  func.func @transform_7(%arg0: i32) -> (i32, i32) {
    %c0_i32 = arith.constant 0 : i32
    %c0_i32_0 = arith.constant 0 : i32
    return %c0_i32, %arg0 : i32, i32
  }
}

</mosaic_0001>

<llo_original>
// kernel: recurrent_gcn_forward.2
$region0: #{recurrent_gcn_forward.2}
  #allocation0 [shape = 'u32[]', space=smem, size = 0x4, offset = 0x4, fixed_abs, tag = 'smem constant byte address 0x4 - core index']
  #allocation1 [shape = 'u32[144,128]{1,0:T(1,128)}', space=vmem, size = 0x12000, scoped, tag = 'internal scratch']
  %s0 = inlined_call_operand.vmem [shape: bf16[316,64], index: 0, kind: input, shape index: {}]
  %s1 = inlined_call_operand.vmem [shape: bf16[10,316], index: 1, kind: input, shape index: {}]
  %s2 = inlined_call_operand.vmem [shape: f32[10,1], index: 2, kind: input, shape index: {}]
  %s3 = inlined_call_operand.vmem [shape: bf16[10,64], index: 3, kind: output, shape index: {}]
  %s4 = sld [smem:[#allocation0]]
  $region22: #{recurrent_gcn_forward.2} parent=0
    _
  %s6 = ssub.s32 1, %s4
  %s7 = scalar_select 0, %s6, %s4
  // Predicated region
  $region2: #{recurrent_gcn_forward.2} parent=0 // pred_check
    _
  $region3: #{recurrent_gcn_forward.2} parent=0 // pred_check_branch
    %9 = sbr.rel (0) target = $region5
  $region4: #{recurrent_gcn_forward.2} parent=0 // pred_region
    _
  $region5: #{recurrent_gcn_forward.2} parent=0 // pred_fallthru
    _
  // Predicated region
  $region6: #{recurrent_gcn_forward.2} parent=0 // pred_check
    _
  $region7: #{recurrent_gcn_forward.2} parent=0 // pred_check_branch
    %11 = sbr.rel (0) target = $region9
  $region8: #{recurrent_gcn_forward.2} parent=0 // pred_region
    _
  $region9: #{recurrent_gcn_forward.2} parent=0 // pred_fallthru
    _
  // Predicated region
  $region10: #{recurrent_gcn_forward.2} parent=0 // pred_check
    _
  $region11: #{recurrent_gcn_forward.2} parent=0 // pred_check_branch
    %13 = sbr.rel (0) target = $region13
  $region12: #{recurrent_gcn_forward.2} parent=0 // pred_region
    _
  $region13: #{recurrent_gcn_forward.2} parent=0 // pred_fallthru
    _
  %v15 = vld [vmem:[%s1] sm:$0xff]
  %v16 = vld [vmem:[%s1 + $0x8] sm:$0xf]
  %v17 = vld [vmem:[%s1 + $0xc] sm:$0x11]
  %v18 = vld [vmem:[%s1 + $0x14] sm:$0x1]
  %v19 = vld [vmem:[%s0] sm:$0xf]
  %v20 = vld [vmem:[%s0 + $0x4] sm:$0xf]
  %v21 = vld [vmem:[%s0 + $0x8] sm:$0xf]
  %v22 = vld [vmem:[%s0 + $0xc] sm:$0xf]
  %v23 = vld [vmem:[%s0 + $0x10] sm:$0xf]
  %v24 = vld [vmem:[%s0 + $0x14] sm:$0xf]
  %v25 = vld [vmem:[%s0 + $0x18] sm:$0xf]
  %v26 = vld [vmem:[%s0 + $0x1c] sm:$0xf]
  %v27 = vld [vmem:[%s0 + $0x20] sm:$0xf]
  %v28 = vld [vmem:[%s0 + $0x24] sm:$0xf]
  %v29 = vld [vmem:[%s0 + $0x28] sm:$0xf]
  %v30 = vld [vmem:[%s0 + $0x2c] sm:$0xf]
  %v31 = vld [vmem:[%s0 + $0x30] sm:$0xf]
  %v32 = vld [vmem:[%s0 + $0x34] sm:$0xf]
  %v33 = vld [vmem:[%s0 + $0x38] sm:$0xf]
  %v34 = vld [vmem:[%s0 + $0x3c] sm:$0xf]
  %v35 = vld [vmem:[%s0 + $0x40] sm:$0xf]
  %v36 = vld [vmem:[%s0 + $0x44] sm:$0xf]
  %v37 = vld [vmem:[%s0 + $0x48] sm:$0xf]
  %v38 = vld [vmem:[%s0 + $0x4c] sm:$0xf]
  %v39 = vld [vmem:[%s0 + $0x50] sm:$0xf]
  %v40 = vld [vmem:[%s0 + $0x54] sm:$0xf]
  %v41 = vld [vmem:[%s0 + $0x58] sm:$0xf]
  %v42 = vld [vmem:[%s0 + $0x5c] sm:$0xf]
  %v43 = vld [vmem:[%s0 + $0x60] sm:$0xf]
  %v44 = vld [vmem:[%s0 + $0x64] sm:$0xf]
  %v45 = vld [vmem:[%s0 + $0x68] sm:$0xf]
  %v46 = vld [vmem:[%s0 + $0x6c] sm:$0xf]
  %v47 = vld [vmem:[%s0 + $0x70] sm:$0xf]
  %v48 = vld [vmem:[%s0 + $0x74] sm:$0xf]
  %v49 = vld [vmem:[%s0 + $0x78] sm:$0xf]
  %v50 = vld [vmem:[%s0 + $0x7c] sm:$0xf]
  %v51 = vld [vmem:[%s0 + $0x80] sm:$0xf]
  %v52 = vld [vmem:[%s0 + $0x84] sm:$0xf]
  %v53 = vld [vmem:[%s0 + $0x88] sm:$0xf]
  %v54 = vld [vmem:[%s0 + $0x8c] sm:$0xf]
  %v55 = vld [vmem:[%s0 + $0x90] sm:$0xf]
  %v56 = vld [vmem:[%s0 + $0x94] sm:$0xf]
  %v57 = vld [vmem:[%s0 + $0x98] sm:$0xf]
  %v58 = vld [vmem:[%s0 + $0x9c] sm:$0x3]
  %v59 = vld [vmem:[%s2] sm:$0xff]
  %v60 = vld [vmem:[%s2 + $0x8] sm:$0x3]
  %62 = vset.pattern.permute.xlu0 0
  %63 = vperm.xlu0 %62, %v59
  %v64 = vpop.permute.xlu0 %63
  %67 = vset.pattern.permute.xlu0 0
  %68 = vperm.xlu0 %67, %v60
  %v69 = vpop.permute.xlu0 %68
  %v75 = vunpack.c.l.b16 %v15
  %v76 = vunpack.c.h.b16 %v15
  %v77 = vunpack.c.l.b16 %v16
  %v78 = vunpack.c.l.b16 %v17
  %v79 = vunpack.c.h.b16 %v17
  %v80 = vunpack.c.l.b16 %v18
  %v81 = vpack.c.b16 %v78, %v75
  %v82 = vpack.c.b16 %v79, %v76
  %v83 = vpack.c.b16 %v80, %v77
  %v126 = vunpack.c.l.b16 %v19
  %v127 = vunpack.c.l.b16 %v20
  %v128 = vunpack.c.l.b16 %v21
  %v129 = vunpack.c.l.b16 %v22
  %v130 = vunpack.c.l.b16 %v23
  %v131 = vunpack.c.l.b16 %v24
  %v132 = vunpack.c.l.b16 %v25
  %v133 = vunpack.c.l.b16 %v26
  %v134 = vunpack.c.l.b16 %v27
  %v135 = vunpack.c.l.b16 %v28
  %v136 = vunpack.c.l.b16 %v29
  %v137 = vunpack.c.l.b16 %v30
  %v138 = vunpack.c.l.b16 %v31
  %v139 = vunpack.c.l.b16 %v32
  %v140 = vunpack.c.l.b16 %v33
  %v141 = vunpack.c.l.b16 %v34
  %v142 = vunpack.c.l.b16 %v35
  %v143 = vunpack.c.l.b16 %v36
  %v144 = vunpack.c.l.b16 %v37
  %v145 = vunpack.c.l.b16 %v38
  %v146 = vunpack.c.l.b16 %v39
  %v147 = vunpack.c.l.b16 %v40
  %v148 = vunpack.c.l.b16 %v41
  %v149 = vunpack.c.l.b16 %v42
  %v150 = vunpack.c.l.b16 %v43
  %v151 = vunpack.c.l.b16 %v44
  %v152 = vunpack.c.l.b16 %v45
  %v153 = vunpack.c.l.b16 %v46
  %v154 = vunpack.c.l.b16 %v47
  %v155 = vunpack.c.l.b16 %v48
  %v156 = vunpack.c.l.b16 %v49
  %v157 = vunpack.c.l.b16 %v50
  %v158 = vunpack.c.l.b16 %v51
  %v159 = vunpack.c.l.b16 %v52
  %v160 = vunpack.c.l.b16 %v53
  %v161 = vunpack.c.l.b16 %v54
  %v162 = vunpack.c.l.b16 %v55
  %v163 = vunpack.c.l.b16 %v56
  %v164 = vunpack.c.l.b16 %v57
  %v165 = vunpack.c.l.b16 %v58
  %v166 = vpack.c.b16 %v127, %v126
  %v167 = vpack.c.b16 %v129, %v128
  %v168 = vpack.c.b16 %v131, %v130
  %v169 = vpack.c.b16 %v133, %v132
  %v170 = vpack.c.b16 %v135, %v134
  %v171 = vpack.c.b16 %v137, %v136
  %v172 = vpack.c.b16 %v139, %v138
  %v173 = vpack.c.b16 %v141, %v140
  %v174 = vpack.c.b16 %v143, %v142
  %v175 = vpack.c.b16 %v145, %v144
  %v176 = vpack.c.b16 %v147, %v146
  %v177 = vpack.c.b16 %v149, %v148
  %v178 = vpack.c.b16 %v151, %v150
  %v179 = vpack.c.b16 %v153, %v152
  %v180 = vpack.c.b16 %v155, %v154
  %v181 = vpack.c.b16 %v157, %v156
  %v182 = vpack.c.b16 %v159, %v158
  %v183 = vpack.c.b16 %v161, %v160
  %v184 = vpack.c.b16 %v163, %v162
  %v185 = vpack.c.b16 %v165, %v164
  %vm205 = vcmask 490496
  %v207 = vsel %vm205, %v83, 0
  %vm209 = vcmask 1045504
  %v211 = vsel %vm209, %v185, 0
  %213 = vmatprep.subr.bf16.mxu0 0
  %214 = vmatpush1.bf16.msra.mxu0 %v166
  %215 = vmatprep.subr.bf16.mxu0 0
  %216 = vmatpush1.bf16.msra.mxu0 %v167
  %217 = vmatprep.subr.bf16.mxu0 0
  %218 = vmatpush1.bf16.msra.mxu0 %v168
  %219 = vmatprep.subr.bf16.mxu0 0
  %220 = vmatpush1.bf16.msra.mxu0 %v169
  %221 = vmatprep.subr.bf16.mxu0 0
  %222 = vmatpush1.bf16.msra.mxu0 %v170
  %223 = vmatprep.subr.bf16.mxu0 0
  %224 = vmatpush1.bf16.msra.mxu0 %v171
  %225 = vmatprep.subr.bf16.mxu0 0
  %226 = vmatpush1.bf16.msra.mxu0 %v172
  %227 = vmatprep.subr.bf16.mxu0 0
  %228 = vmatpush1.bf16.msra.mxu0 %v173
  %229 = vmatprep.subr.bf16.mxu0 0
  %230 = vmatpush1.bf16.msra.mxu0 %v174
  %231 = vmatprep.subr.bf16.mxu0 0
  %232 = vmatpush1.bf16.msra.mxu0 %v175
  %233 = vmatprep.subr.bf16.mxu0 0
  %234 = vmatpush1.bf16.msra.mxu0 %v176
  %235 = vmatprep.subr.bf16.mxu0 0
  %236 = vmatpush1.bf16.msra.mxu0 %v177
  %237 = vmatprep.subr.bf16.mxu0 0
  %238 = vmatpush1.bf16.msra.mxu0 %v178
  %239 = vmatprep.subr.bf16.mxu0 0
  %240 = vmatpush1.bf16.msra.mxu0 %v179
  %241 = vmatprep.subr.bf16.mxu0 0
  %242 = vmatpush1.bf16.msra.mxu0 %v180
  %243 = vmatprep.subr.bf16.mxu0 0
  %244 = vmatpush1.bf16.msra.mxu0 %v181
  %245 = vmatprep.mubr.bf16.mxu0 %v82
  %246 = vmatmul.mubr.bf16.gmra.mrb[0].mxu0 %v81
  %v247 = vpop.f32.mrb[0].mxu0
  %v248 = vadd.f32 %v64, %v247
  %v249 = vpop.f32.mrb[0].mxu0
  %v250 = vpop.f32.mrb[0].mxu0
  %v251 = vadd.f32 %v69, %v250
  %v252 = vpop.f32.mrb[0].mxu0
  %253 = vdwg.mxu0
  %254 = vmatprep.subr.bf16.mxu0 0
  %255 = vmatpush1.bf16.msra.mxu0 %v182
  %256 = vmatprep.subr.bf16.mxu0 0
  %257 = vmatpush1.bf16.msra.mxu0 %v183
  %258 = vmatprep.subr.bf16.mxu0 0
  %259 = vmatpush1.bf16.msra.mxu0 %v184
  %260 = vmatprep.subr.bf16.mxu0 0
  %261 = vmatpush1.bf16.msra.mxu0 %v211
  %262 = vmatprep.subr.bf16.mxu0 0
  %263 = vmatpush1.bf16.msra.mxu0 0
  %264 = vmatprep.subr.bf16.mxu0 0
  %265 = vmatpush1.bf16.msra.mxu0 0
  %266 = vmatprep.subr.bf16.mxu0 0
  %267 = vmatpush1.bf16.msra.mxu0 0
  %268 = vmatprep.subr.bf16.mxu0 0
  %269 = vmatpush1.bf16.msra.mxu0 0
  %270 = vmatprep.subr.bf16.mxu0 0
  %271 = vmatpush1.bf16.msra.mxu0 0
  %272 = vmatprep.subr.bf16.mxu0 0
  %273 = vmatpush1.bf16.msra.mxu0 0
  %274 = vmatprep.subr.bf16.mxu0 0
  %275 = vmatpush1.bf16.msra.mxu0 0
  %276 = vmatprep.subr.bf16.mxu0 0
  %277 = vmatpush1.bf16.msra.mxu0 0
  %278 = vmatprep.subr.bf16.mxu0 0
  %279 = vmatpush1.bf16.msra.mxu0 0
  %280 = vmatprep.subr.bf16.mxu0 0
  %281 = vmatpush1.bf16.msra.mxu0 0
  %282 = vmatprep.subr.bf16.mxu0 0
  %283 = vmatpush1.bf16.msra.mxu0 0
  %284 = vmatprep.subr.bf16.mxu0 0
  %285 = vmatpush1.bf16.msra.mxu0 0
  %286 = vmatprep.mubr.bf16.mxu0 0
  %287 = vmatmul.mubr.bf16.gmra.mrb[0].mxu0 %v207
  %v288 = vpop.f32.mrb[0].mxu0
  %v289 = vadd.f32 %v248, %v288
  %v290 = vpop.f32.mrb[0].mxu0
  %v291 = vpop.f32.mrb[0].mxu0
  %v292 = vadd.f32 %v251, %v291
  %v293 = vpop.f32.mrb[0].mxu0
  %294 = vdwg.mxu0
  %v295 = vpack.c.bf16 %v292, %v289
  %v297 = vunpack.c.l.b16 %v295
  %v298 = vunpack.c.h.b16 %v295
  %v299 = vpack.c.b16 %v297, %v297
  %v300 = vpack.c.b16 %v298, %v298
  %vm303 = vcmask 519168
  %304 = vst.msk [vmem:[%s3] sm:$0xf] %vm303, %v299
  %vm305 = vcmask 516096
  %306 = vst.msk [vmem:[%s3 + $0x4] sm:$0x1] %vm305, %v300
  // Predicated region
  $region14: #{recurrent_gcn_forward.2} parent=0 // pred_check
    _
  $region15: #{recurrent_gcn_forward.2} parent=0 // pred_check_branch
    %308 = sbr.rel (0) target = $region17
  $region16: #{recurrent_gcn_forward.2} parent=0 // pred_region
    _
  $region17: #{recurrent_gcn_forward.2} parent=0 // pred_fallthru
    _
  // Predicated region
  $region18: #{recurrent_gcn_forward.2} parent=0 // pred_check
    _
  $region19: #{recurrent_gcn_forward.2} parent=0 // pred_check_branch
    %310 = sbr.rel (0) target = $region21
  $region20: #{recurrent_gcn_forward.2} parent=0 // pred_region
    _
  $region21: #{recurrent_gcn_forward.2} parent=0 // pred_fallthru
    _

// kernel: recurrent_gcn_forward.3
$region0: #{recurrent_gcn_forward.3}
  #allocation0 [shape = 'u32[]', space=smem, size = 0x4, offset = 0x4, fixed_abs, tag = 'smem constant byte address 0x4 - core index']
  #allocation1 [shape = 'u32[144,128]{1,0:T(1,128)}', space=vmem, size = 0x12000, scoped, tag = 'internal scratch']
  #allocation2 [shape = 'f32[1,1]{1,0:T(1,128)S(1)}', space=vmem, size = 0x200, scoped, tag = 'scoped memory for recurrent_gcn_forward.3']
  %s0 = inlined_call_operand.vmem [shape: bf16[10,64], index: 0, kind: input, shape index: {}, may-alias: {0,1}]
  %s1 = inlined_call_operand.vmem [shape: bf16[10,64], index: 1, kind: input, shape index: {}, may-alias: {0,1}]
  %s2 = inlined_call_operand.vmem [shape: bf16[64,64], index: 2, kind: input, shape index: {}]
  %s3 = inlined_call_operand.vmem [shape: bf16[64,20], index: 3, kind: input, shape index: {}]
  %s4 = inlined_call_operand.vmem [shape: f32[64,1], index: 4, kind: input, shape index: {}]
  %s5 = inlined_call_operand.vmem [shape: f32[32,1], index: 5, kind: input, shape index: {}]
  %s6 = inlined_call_operand.<no memory space> [shape: f32[1,1], index: 6, kind: input, shape index: {}]
  %s7 = inlined_call_operand.hbm [shape: f32[1,64], index: 7, kind: output, shape index: {}]
  %s8 = sld [smem:[#allocation0]]
  $region38: #{recurrent_gcn_forward.3} parent=0
    _
  %s10 = ssub.s32 1, %s8
  %s11 = scalar_select 0, %s10, %s8
  %v12 = vstv %s6
  %13 = vst [vmem:[#allocation2] sm:$0x1] %v12
  $region1: #{recurrent_gcn_forward.3} parent=0
    #allocation3 [shape = 'u8[512]{0}', space=vmem, size = 0x400, scoped, tag = 'output window, operand 0, single buffered']
    #allocation4 [shape = 's32[1]{0}', space=sflag, size = 0x4, scoped, tag = 'scoped memory for recurrent_gcn_forward.3']
    %14 = vsyncpa [#allocation4], 0
    // Predicated region
    $region2: #{recurrent_gcn_forward.3} parent=1 // pred_check
      _
    $region3: #{recurrent_gcn_forward.3} parent=1 // pred_check_branch
      %16 = sbr.rel (0) target = $region5
    $region4: #{recurrent_gcn_forward.3} parent=1 // pred_region
      _
    $region5: #{recurrent_gcn_forward.3} parent=1 // pred_fallthru
      _
    // Predicated region
    $region6: #{recurrent_gcn_forward.3} parent=1 // pred_check
      _
    $region7: #{recurrent_gcn_forward.3} parent=1 // pred_check_branch
      %18 = sbr.rel (0) target = $region9
    $region8: #{recurrent_gcn_forward.3} parent=1 // pred_region
      _
    $region9: #{recurrent_gcn_forward.3} parent=1 // pred_fallthru
      _
    // Predicated region
    $region10: #{recurrent_gcn_forward.3} parent=1 // pred_check
      _
    $region11: #{recurrent_gcn_forward.3} parent=1 // pred_check_branch
      %20 = sbr.rel (0) target = $region13
    $region12: #{recurrent_gcn_forward.3} parent=1 // pred_region
      _
    $region13: #{recurrent_gcn_forward.3} parent=1 // pred_fallthru
      _
    // Predicated region
    $region14: #{recurrent_gcn_forward.3} parent=1 // pred_check
      _
    $region15: #{recurrent_gcn_forward.3} parent=1 // pred_check_branch
      %22 = sbr.rel (0) target = $region17
    $region16: #{recurrent_gcn_forward.3} parent=1 // pred_region
      _
    $region17: #{recurrent_gcn_forward.3} parent=1 // pred_fallthru
      _
    // Predicated region
    $region18: #{recurrent_gcn_forward.3} parent=1 // pred_check
      _
    $region19: #{recurrent_gcn_forward.3} parent=1 // pred_check_branch
      %24 = sbr.rel (0) target = $region21
    $region20: #{recurrent_gcn_forward.3} parent=1 // pred_region
      _
    $region21: #{recurrent_gcn_forward.3} parent=1 // pred_fallthru
      _
    // Predicated region
    $region22: #{recurrent_gcn_forward.3} parent=1 // pred_check
      _
    $region23: #{recurrent_gcn_forward.3} parent=1 // pred_check_branch
      %26 = sbr.rel (0) target = $region25
    $region24: #{recurrent_gcn_forward.3} parent=1 // pred_region
      _
    $region25: #{recurrent_gcn_forward.3} parent=1 // pred_fallthru
      _
    // Predicated region
    $region26: #{recurrent_gcn_forward.3} parent=1 // pred_check
      _
    $region27: #{recurrent_gcn_forward.3} parent=1 // pred_check_branch
      %28 = sbr.rel (0) target = $region29
    $region28: #{recurrent_gcn_forward.3} parent=1 // pred_region
      _
    $region29: #{recurrent_gcn_forward.3} parent=1 // pred_fallthru
      _
    %v30 = vld [vmem:[%s0] sm:$0xf]
    %v31 = vld [vmem:[%s0 + $0x4] sm:$0x1]
    %v32 = vld [vmem:[%s2] sm:$0xf]
    %v33 = vld [vmem:[%s2 + $0x4] sm:$0xf]
    %v34 = vld [vmem:[%s2 + $0x8] sm:$0xf]
    %v35 = vld [vmem:[%s2 + $0xc] sm:$0xf]
    %v36 = vld [vmem:[%s2 + $0x10] sm:$0xf]
    %v37 = vld [vmem:[%s2 + $0x14] sm:$0xf]
    %v38 = vld [vmem:[%s2 + $0x18] sm:$0xf]
    %v39 = vld [vmem:[%s2 + $0x1c] sm:$0xf]
    %v42 = vunpack.c.l.b16 %v30
    %v43 = vunpack.c.l.b16 %v31
    %v44 = vpack.c.b16 %v43, %v42
    %v53 = vunpack.c.l.b16 %v32
    %v54 = vunpack.c.l.b16 %v33
    %v55 = vunpack.c.l.b16 %v34
    %v56 = vunpack.c.l.b16 %v35
    %v57 = vunpack.c.l.b16 %v36
    %v58 = vunpack.c.l.b16 %v37
    %v59 = vunpack.c.l.b16 %v38
    %v60 = vunpack.c.l.b16 %v39
    %v61 = vpack.c.b16 %v54, %v53
    %v62 = vpack.c.b16 %v56, %v55
    %v63 = vpack.c.b16 %v58, %v57
    %v64 = vpack.c.b16 %v60, %v59
    %vm69 = vcmask 523264
    %v71 = vsel %vm69, %v44, 0
    %73 = vmatprep.subr.bf16.mxu0 0
    %74 = vmatpush1.bf16.msra.mxu0 %v61
    %75 = vmatprep.subr.bf16.mxu0 0
    %76 = vmatpush1.bf16.msra.mxu0 %v62
    %77 = vmatprep.subr.bf16.mxu0 0
    %78 = vmatpush1.bf16.msra.mxu0 %v63
    %79 = vmatprep.subr.bf16.mxu0 0
    %80 = vmatpush1.bf16.msra.mxu0 %v64
    %81 = vmatprep.subr.bf16.mxu0 0
    %82 = vmatpush1.bf16.msra.mxu0 0
    %83 = vmatprep.subr.bf16.mxu0 0
    %84 = vmatpush1.bf16.msra.mxu0 0
    %85 = vmatprep.subr.bf16.mxu0 0
    %86 = vmatpush1.bf16.msra.mxu0 0
    %87 = vmatprep.subr.bf16.mxu0 0
    %88 = vmatpush1.bf16.msra.mxu0 0
    %89 = vmatprep.subr.bf16.mxu0 0
    %90 = vmatpush1.bf16.msra.mxu0 0
    %91 = vmatprep.subr.bf16.mxu0 0
    %92 = vmatpush1.bf16.msra.mxu0 0
    %93 = vmatprep.subr.bf16.mxu0 0
    %94 = vmatpush1.bf16.msra.mxu0 0
    %95 = vmatprep.subr.bf16.mxu0 0
    %96 = vmatpush1.bf16.msra.mxu0 0
    %97 = vmatprep.subr.bf16.mxu0 0
    %98 = vmatpush1.bf16.msra.mxu0 0
    %99 = vmatprep.subr.bf16.mxu0 0
    %100 = vmatpush1.bf16.msra.mxu0 0
    %101 = vmatprep.subr.bf16.mxu0 0
    %102 = vmatpush1.bf16.msra.mxu0 0
    %103 = vmatprep.subr.bf16.mxu0 0
    %104 = vmatpush1.bf16.msra.mxu0 0
    %105 = vmatprep.mubr.bf16.mxu0 0
    %106 = vmatmul.mubr.bf16.gmra.mrb[0].mxu0 %v71
    %v107 = vpop.f32.mrb[0].mxu0
    %v108 = vadd.f32 0.0, %v107
    %v109 = vpop.f32.mrb[0].mxu0
    %v110 = vpop.f32.mrb[0].mxu0
    %v111 = vadd.f32 0.0, %v110
    %v112 = vpop.f32.mrb[0].mxu0
    %113 = vdwg.mxu0
    %v114 = vld [vmem:[%s1] sm:$0xf]
    %v115 = vld [vmem:[%s1 + $0x4] sm:$0x1]
    %v116 = vpack.c.bf16 %v111, %v108
    %v119 = vunpack.c.l.b16 %v114
    %v120 = vunpack.c.l.b16 %v115
    %v121 = vpack.c.b16 %v120, %v119
    %v123 = vrot.slane %v116, 3
    %vm124 = vcmask 1044480
    %v127 = vsel %vm124, %v121, %v123
    %v129 = vld [vmem:[%s3] sm:$0xf]
    %v130 = vld [vmem:[%s3 + $0x4] sm:$0xf]
    %v131 = vld [vmem:[%s3 + $0x8] sm:$0xf]
    %v132 = vld [vmem:[%s3 + $0xc] sm:$0xf]
    %v133 = vld [vmem:[%s3 + $0x10] sm:$0xf]
    %v134 = vld [vmem:[%s3 + $0x14] sm:$0xf]
    %v135 = vld [vmem:[%s3 + $0x18] sm:$0xf]
    %v136 = vld [vmem:[%s3 + $0x1c] sm:$0xf]
    %v137 = vld [vmem:[%s4] sm:$0xff]
    %v138 = vld [vmem:[%s4 + $0x8] sm:$0xff]
    %v139 = vld [vmem:[%s4 + $0x10] sm:$0xff]
    %v140 = vld [vmem:[%s4 + $0x18] sm:$0xff]
    %v141 = vld [vmem:[%s4 + $0x20] sm:$0xff]
    %v142 = vld [vmem:[%s4 + $0x28] sm:$0xff]
    %v143 = vld [vmem:[%s4 + $0x30] sm:$0xff]
    %v144 = vld [vmem:[%s4 + $0x38] sm:$0xff]
    %146 = vset.pattern.permute.xlu0 0
    %147 = vperm.xlu0 %146, %v137
    %v148 = vpop.permute.xlu0 %147
    %151 = vset.pattern.permute.xlu0 0
    %152 = vperm.xlu0 %151, %v138
    %v153 = vpop.permute.xlu0 %152
    %156 = vset.pattern.permute.xlu0 0
    %157 = vperm.xlu0 %156, %v139
    %v158 = vpop.permute.xlu0 %157
    %161 = vset.pattern.permute.xlu0 0
    %162 = vperm.xlu0 %161, %v140
    %v163 = vpop.permute.xlu0 %162
    %166 = vset.pattern.permute.xlu0 0
    %167 = vperm.xlu0 %166, %v141
    %v168 = vpop.permute.xlu0 %167
    %171 = vset.pattern.permute.xlu0 0
    %172 = vperm.xlu0 %171, %v142
    %v173 = vpop.permute.xlu0 %172
    %176 = vset.pattern.permute.xlu0 0
    %177 = vperm.xlu0 %176, %v143
    %v178 = vpop.permute.xlu0 %177
    %181 = vset.pattern.permute.xlu0 0
    %182 = vperm.xlu0 %181, %v144
    %v183 = vpop.permute.xlu0 %182
    %v193 = vunpack.c.l.b16 %v129
    %v194 = vunpack.c.l.b16 %v130
    %v195 = vunpack.c.l.b16 %v131
    %v196 = vunpack.c.l.b16 %v132
    %v197 = vunpack.c.l.b16 %v133
    %v198 = vunpack.c.l.b16 %v134
    %v199 = vunpack.c.l.b16 %v135
    %v200 = vunpack.c.l.b16 %v136
    %v201 = vpack.c.b16 %v194, %v193
    %v202 = vpack.c.b16 %v196, %v195
    %v203 = vpack.c.b16 %v198, %v197
    %v204 = vpack.c.b16 %v200, %v199
    %vm205 = vcmask 162816
    %v207 = vsel %vm205, %v201, 0
    %v210 = vsel %vm205, %v202, 0
    %v213 = vsel %vm205, %v203, 0
    %v216 = vsel %vm205, %v204, 0
    %vm218 = vcmask 1041408
    %v219 = vsel %vm218, %v123, 0
    %221 = vmatprep.subr.bf16.mxu0 0
    %222 = vmatpush1.bf16.msra.mxu0 %v127
    %223 = vmatprep.subr.bf16.mxu0 0
    %224 = vmatpush1.bf16.msra.mxu0 %v219
    %225 = vmatprep.subr.bf16.mxu0 0
    %226 = vmatpush1.bf16.msra.mxu0 0
    %227 = vmatprep.subr.bf16.mxu0 0
    %228 = vmatpush1.bf16.msra.mxu0 0
    %229 = vmatprep.subr.bf16.mxu0 0
    %230 = vmatpush1.bf16.msra.mxu0 0
    %231 = vmatprep.subr.bf16.mxu0 0
    %232 = vmatpush1.bf16.msra.mxu0 0
    %233 = vmatprep.subr.bf16.mxu0 0
    %234 = vmatpush1.bf16.msra.mxu0 0
    %235 = vmatprep.subr.bf16.mxu0 0
    %236 = vmatpush1.bf16.msra.mxu0 0
    %237 = vmatprep.subr.bf16.mxu0 0
    %238 = vmatpush1.bf16.msra.mxu0 0
    %239 = vmatprep.subr.bf16.mxu0 0
    %240 = vmatpush1.bf16.msra.mxu0 0
    %241 = vmatprep.subr.bf16.mxu0 0
    %242 = vmatpush1.bf16.msra.mxu0 0
    %243 = vmatprep.subr.bf16.mxu0 0
    %244 = vmatpush1.bf16.msra.mxu0 0
    %245 = vmatprep.subr.bf16.mxu0 0
    %246 = vmatpush1.bf16.msra.mxu0 0
    %247 = vmatprep.subr.bf16.mxu0 0
    %248 = vmatpush1.bf16.msra.mxu0 0
    %249 = vmatprep.subr.bf16.mxu0 0
    %250 = vmatpush1.bf16.msra.mxu0 0
    %251 = vmatprep.subr.bf16.mxu0 0
    %252 = vmatpush1.bf16.msra.mxu0 0
    %253 = vmatprep.mubr.bf16.mxu0 0
    %254 = vmatmul.mubr.bf16.gmra.mrb[0].mxu0 %v207
    %v255 = vpop.f32.mrb[0].mxu0
    %v256 = vadd.f32 %v148, %v255
    %v257 = vpop.f32.mrb[0].mxu0
    %v258 = vpop.f32.mrb[0].mxu0
    %v259 = vadd.f32 %v153, %v258
    %v260 = vpop.f32.mrb[0].mxu0
    %261 = vmatprep.mubr.bf16.mxu0 0
    %262 = vmatmul.mubr.bf16.gmra.mrb[0].mxu0 %v210
    %v263 = vpop.f32.mrb[0].mxu0
    %v264 = vadd.f32 %v158, %v263
    %v265 = vpop.f32.mrb[0].mxu0
    %v266 = vpop.f32.mrb[0].mxu0
    %v267 = vadd.f32 %v163, %v266
    %v268 = vpop.f32.mrb[0].mxu0
    %269 = vmatprep.mubr.bf16.mxu0 0
    %270 = vmatmul.mubr.bf16.gmra.mrb[0].mxu0 %v213
    %v271 = vpop.f32.mrb[0].mxu0
    %v272 = vadd.f32 %v168, %v271
    %v273 = vpop.f32.mrb[0].mxu0
    %v274 = vpop.f32.mrb[0].mxu0
    %v275 = vadd.f32 %v173, %v274
    %v276 = vpop.f32.mrb[0].mxu0
    %277 = vmatprep.mubr.bf16.mxu0 0
    %278 = vmatmul.mubr.bf16.gmra.mrb[0].mxu0 %v216
    %v279 = vpop.f32.mrb[0].mxu0
    %v280 = vadd.f32 %v178, %v279
    %v281 = vpop.f32.mrb[0].mxu0
    %v282 = vpop.f32.mrb[0].mxu0
    %v283 = vadd.f32 %v183, %v282
    %v284 = vpop.f32.mrb[0].mxu0
    %285 = vdwg.mxu0
    %v286 = vxor.u32 %v256, 2147483648
    %v287 = vxor.u32 %v259, 2147483648
    %v288 = vxor.u32 %v264, 2147483648
    %v289 = vxor.u32 %v267, 2147483648
    %v290 = vmul.f32 %v286, 1.442695
    %v291 = vpow.pop %v290
    %v292 = vmul.f32 %v287, 1.442695
    %v293 = vpow.pop %v292
    %v294 = vmul.f32 %v288, 1.442695
    %v295 = vpow.pop %v294
    %v296 = vmul.f32 %v289, 1.442695
    %v297 = vpow.pop %v296
    %v298 = vadd.f32 %v291, 1.0
    %v299 = vadd.f32 %v293, 1.0
    %v300 = vadd.f32 %v295, 1.0
    %v301 = vadd.f32 %v297, 1.0
    %v302 = vrcp.pop %v298
    %v303 = vmul.f32 1.0, %v302
    %v304 = vrcp.pop %v299
    %v305 = vmul.f32 1.0, %v304
    %v306 = vrcp.pop %v300
    %v307 = vmul.f32 1.0, %v306
    %v308 = vrcp.pop %v301
    %v309 = vmul.f32 1.0, %v308
    %v310 = vtanh.pop %v272
    %v311 = vtanh.pop %v275
    %v312 = vtanh.pop %v280
    %v313 = vtanh.pop %v283
    %v314 = vsub.f32 1.0, %v303
    %v315 = vsub.f32 1.0, %v305
    %v316 = vsub.f32 1.0, %v307
    %v317 = vsub.f32 1.0, %v309
    %v318 = vmul.f32 %v314, %v310
    %v319 = vmul.f32 %v315, %v311
    %v320 = vmul.f32 %v316, %v312
    %v321 = vmul.f32 %v317, %v313
    %v322 = vmax.f32 %v318, 0.0
    %v323 = vmax.f32 %v319, 0.0
    %v324 = vmax.f32 %v320, 0.0
    %v325 = vmax.f32 %v321, 0.0
    %v326 = vld [vmem:[%s5] sm:$0xff]
    %v327 = vld [vmem:[%s5 + $0x8] sm:$0xff]
    %v328 = vld [vmem:[%s5 + $0x10] sm:$0xff]
    %v329 = vld [vmem:[%s5 + $0x18] sm:$0xff]
    %331 = vset.pattern.permute.xlu0 0
    %332 = vperm.xlu0 %331, %v326
    %v333 = vpop.permute.xlu0 %332
    %336 = vset.pattern.permute.xlu0 0
    %337 = vperm.xlu0 %336, %v327
    %v338 = vpop.permute.xlu0 %337
    %341 = vset.pattern.permute.xlu0 0
    %342 = vperm.xlu0 %341, %v328
    %v343 = vpop.permute.xlu0 %342
    %346 = vset.pattern.permute.xlu0 0
    %347 = vperm.xlu0 %346, %v329
    %v348 = vpop.permute.xlu0 %347
    %v350 = vmul.f32 %v322, %v333
    %v351 = vmul.f32 %v323, %v338
    %v352 = vmul.f32 %v324, %v343
    %v353 = vmul.f32 %v325, %v348
    %v354 = vsel %vm69, %v350, 0.0
    %v355 = vsel %vm69, %v351, 0.0
    %v356 = vadd.f32 %v354, %v355
    %v357 = vsel %vm69, %v352, 0.0
    %v358 = vadd.f32 %v356, %v357
    %v359 = vsel %vm69, %v353, 0.0
    %v360 = vadd.f32 %v358, %v359
    %v361 = vrot.slane %v360, 4
    %v362 = vadd.f32 %v360, %v361
    %v363 = vrot.slane %v362, 2
    %v364 = vadd.f32 %v362, %v363
    %v365 = vrot.slane %v364, 1
    %v366 = vadd.f32 %v364, %v365
    %v367 = vld [vmem:[#allocation2] sm:$0x1]
    %369 = vset.pattern.permute.xlu0 0
    %370 = vperm.xlu0 %369, %v367
    %v371 = vpop.permute.xlu0 %370
    %v373 = vlaneseq
    %v374 = vshrl.u32 %v373, 7
    %v375 = vsub.s32 0, %v374
    %v376 = vrot.slane %v371, %v375
    %v377 = vadd.f32 %v366, %v376
    %v378 = vxor.u32 %v377, 2147483648
    %v379 = vmul.f32 %v378, 1.442695
    %v380 = vpow.pop %v379
    %v381 = vadd.f32 %v380, 1.0
    %v382 = vrcp.pop %v381
    %v383 = vmul.f32 1.0, %v382
    %vm384 = vcmask 516096
    %385 = vst.msk [vmem:[#allocation3] sm:$0x1] %vm384, %v383
    // Predicated region
    $region30: #{recurrent_gcn_forward.3} parent=1 // pred_check
      _
    $region31: #{recurrent_gcn_forward.3} parent=1 // pred_check_branch
      %387 = sbr.rel (0) target = $region33
    $region32: #{recurrent_gcn_forward.3} parent=1 // pred_region
      %s389 = ssub.s32 16, 16
      %390 = vsyncadd [#allocation4], %s389
      %s392 = sshll.u32 [#allocation3], 4
      %s393 = int_to_ptr.vmem [resolvable:$true] %s392
      %395 = dma.vmem_to_hbm [thread:$0]  %s393, 16, %s7, [#allocation4]
    $region33: #{recurrent_gcn_forward.3} parent=1 // pred_fallthru
      _
    // Predicated region
    $region34: #{recurrent_gcn_forward.3} parent=1 // pred_check
      _
    $region35: #{recurrent_gcn_forward.3} parent=1 // pred_check_branch
      %397 = sbr.rel (0) target = $region37
    $region36: #{recurrent_gcn_forward.3} parent=1 // pred_region
      %398 = dma.done [#allocation4], 16
    $region37: #{recurrent_gcn_forward.3} parent=1 // pred_fallthru
      _
    %399 = vsyncpa [#allocation4], 1

</llo_original>
